<compile_context>
chip_gen: v7x
topology: tpu7x:2x2x1
jax: 0.10.0
libtpu: 0.0.40
codegen_flags: <defaults>
</compile_context>

<pallas_src>
import functools

import jax
import jax.numpy as jnp
from jax.experimental import pallas as pl
from jax.experimental.pallas import tpu as pltpu


def mlp_kernel(x_ref, w1_ref, b1_ref, w2_ref, b2_ref, w3_ref, b3_ref, o_ref):
    x = x_ref[...]  # (TB, F)

    # fc1 + relu
    h1 = jnp.dot(x, w1_ref[...], preferred_element_type=jnp.float32) + b1_ref[...]
    h1 = jnp.maximum(h1, 0.0)

    # fc2 + relu
    h2 = jnp.dot(h1, w2_ref[...], preferred_element_type=jnp.float32) + b2_ref[...]
    h2 = jnp.maximum(h2, 0.0)

    # fc3 + sigmoid  (reciprocal instead of a VALU divide sequence)
    h3 = jnp.dot(h2, w3_ref[...], preferred_element_type=jnp.float32) + b3_ref[...]
    o_ref[...] = pl.reciprocal(1.0 + jnp.exp(-h3), approx=False).astype(o_ref.dtype)


def _round_up(n, m):
    return ((n + m - 1) // m) * m


@functools.partial(jax.jit, static_argnames=("block_rows",))
def mlp_forward(x, params, *, block_rows=2048):
    w1, b1, w2, b2, w3, b3 = params
    B, F = x.shape

    # Batch tile: multiple of 8 (sublane constraint), capped by block_rows.
    TB = _round_up(min(block_rows, _round_up(B, 8)), 8)
    B_pad = _round_up(B, TB)
    if B_pad != B:
        x = jnp.pad(x, ((0, B_pad - B), (0, 0)))
    grid = (B_pad // TB,)

    # Weights/biases: full-array blocks with a constant index_map -> DMA'd once,
    # VMEM-resident for the whole grid.  Keep them un-tiled so the 32/50/25/1
    # dims never hit the (8,128) block constraint.
    def resident(a):
        return pl.BlockSpec(a.shape, lambda i: (0,) * a.ndim)

    out = pl.pallas_call(
        mlp_kernel,
        grid=grid,
        in_specs=[
            pl.BlockSpec((TB, F), lambda i: (i, 0)),  # streamed x tiles
            resident(w1), resident(b1),
            resident(w2), resident(b2),
            resident(w3), resident(b3),
        ],
        out_specs=pl.BlockSpec((TB, 1), lambda i: (i, 0)),
        out_shape=jax.ShapeDtypeStruct((B_pad, 1), jnp.float32),
        compiler_params=pltpu.CompilerParams(
            dimension_semantics=("parallel",),
        ),
    )(x, w1, b1, w2, b2, w3, b3)

    return out[:B]


def init_params(key, input_features):
    # Deterministic init mimicking torch.nn.Linear defaults:
    # weight, bias ~ U(-1/sqrt(fan_in), 1/sqrt(fan_in)). Stored as (in, out).
    dims = [(input_features, 50), (50, 25), (25, 1)]
    params = []
    for fan_in, fan_out in dims:
        key, kw, kb = jax.random.split(key, 3)
        bound = 1.0 / jnp.sqrt(jnp.float32(fan_in))
        w = jax.random.uniform(kw, (fan_in, fan_out), jnp.float32, -bound, bound)
        b = jax.random.uniform(kb, (1, fan_out), jnp.float32, -bound, bound)
        params += [w, b]
    return tuple(params)


def reference_forward(x, params):
    w1, b1, w2, b2, w3, b3 = params
    h = jax.nn.relu(x @ w1 + b1)
    h = jax.nn.relu(h @ w2 + b2)
    return jax.nn.sigmoid(h @ w3 + b3)


if __name__ == "__main__":
    key = jax.random.PRNGKey(0)
    k_x, k_p, k_x2 = jax.random.split(key, 3)

    batch, input_features = 8, 32
    x = jax.random.normal(k_x, (batch, input_features), jnp.float32)
    params = init_params(k_p, input_features)

    out = jax.block_until_ready(mlp_forward(x, params))
    ref = reference_forward(x, params)
    assert out.shape == (batch, 1)
    assert jnp.allclose(out, ref, atol=1e-5, rtol=1e-5)

    # Exercise the multi-step batch grid: non-multiple batch (padding path),
    # 3 grid steps with VMEM-resident weights.
    batch2 = 300
    x2 = jax.random.normal(k_x2, (batch2, input_features), jnp.float32)
    out2 = jax.block_until_ready(mlp_forward(x2, params, block_rows=128))
    ref2 = reference_forward(x2, params)
    assert out2.shape == (batch2, 1)
    assert jnp.allclose(out2, ref2, atol=1e-5, rtol=1e-5)

    print("KERNEL_OK")
</pallas_src>

<mosaic_0001>
module attributes {stable_mosaic.version = 11 : i64} {
  func.func @mlp_kernel(%arg0: i32, %arg1: memref<8x32xf32, #tpu.memory_space<vmem>>, %arg2: memref<32x50xf32, #tpu.memory_space<vmem>>, %arg3: memref<1x50xf32, #tpu.memory_space<vmem>>, %arg4: memref<50x25xf32, #tpu.memory_space<vmem>>, %arg5: memref<1x25xf32, #tpu.memory_space<vmem>>, %arg6: memref<25x1xf32, #tpu.memory_space<vmem>>, %arg7: memref<1x1xf32, #tpu.memory_space<vmem>>, %arg8: memref<8x1xf32, #tpu.memory_space<vmem>>) attributes {dimension_semantics = [#tpu.dimension_semantics<parallel>], iteration_bounds = array<i64: 1>, scalar_prefetch = 0 : i64, scratch_operands = 0 : i64, tpu.core_type = #tpu.core_type<tc>, window_params = [{transform_indices = @transform_0, window_bounds = array<i64: 8, 32>}, {pipeline_mode = #tpu.pipeline_mode<synchronous>, transform_indices = @transform_1, window_bounds = array<i64: 32, 50>}, {pipeline_mode = #tpu.pipeline_mode<synchronous>, transform_indices = @transform_2, window_bounds = array<i64: 1, 50>}, {pipeline_mode = #tpu.pipeline_mode<synchronous>, transform_indices = @transform_3, window_bounds = array<i64: 50, 25>}, {pipeline_mode = #tpu.pipeline_mode<synchronous>, transform_indices = @transform_4, window_bounds = array<i64: 1, 25>}, {pipeline_mode = #tpu.pipeline_mode<synchronous>, transform_indices = @transform_5, window_bounds = array<i64: 25, 1>}, {pipeline_mode = #tpu.pipeline_mode<synchronous>, transform_indices = @transform_6, window_bounds = array<i64: 1, 1>}, {transform_indices = @transform_7, window_bounds = array<i64: 8, 1>}]} {
    %c0 = arith.constant 0 : index
    %c0_0 = arith.constant 0 : index
    %0 = vector.load %arg1[%c0, %c0_0] : memref<8x32xf32, #tpu.memory_space<vmem>>, vector<8x32xf32>
    %c0_1 = arith.constant 0 : index
    %c0_2 = arith.constant 0 : index
    %1 = vector.load %arg2[%c0_1, %c0_2] : memref<32x50xf32, #tpu.memory_space<vmem>>, vector<32x50xf32>
    %cst = arith.constant dense<0.000000e+00> : vector<8x50xf32>
    %2 = tpu.matmul %0, %1, %cst {dimension_numbers = #tpu.dot_dimension_numbers<[1], [0], [0], [1], [0, 0, 1, 1], [], []>} : vector<8x32xf32>, vector<32x50xf32>, vector<8x50xf32> -> vector<8x50xf32>
    %c0_3 = arith.constant 0 : index
    %c0_4 = arith.constant 0 : index
    %3 = vector.load %arg3[%c0_3, %c0_4] : memref<1x50xf32, #tpu.memory_space<vmem>>, vector<1x50xf32>
    %4 = vector.broadcast %3 : vector<1x50xf32> to vector<8x50xf32>
    %5 = arith.addf %2, %4 : vector<8x50xf32>
    %cst_5 = arith.constant 0.000000e+00 : f32
    %6 = vector.broadcast %cst_5 : f32 to vector<8x50xf32>
    %7 = arith.maximumf %5, %6 : vector<8x50xf32>
    %c0_6 = arith.constant 0 : index
    %c0_7 = arith.constant 0 : index
    %8 = vector.load %arg4[%c0_6, %c0_7] : memref<50x25xf32, #tpu.memory_space<vmem>>, vector<50x25xf32>
    %cst_8 = arith.constant dense<0.000000e+00> : vector<8x25xf32>
    %9 = tpu.matmul %7, %8, %cst_8 {dimension_numbers = #tpu.dot_dimension_numbers<[1], [0], [0], [1], [0, 0, 1, 1], [], []>} : vector<8x50xf32>, vector<50x25xf32>, vector<8x25xf32> -> vector<8x25xf32>
    %c0_9 = arith.constant 0 : index
    %c0_10 = arith.constant 0 : index
    %10 = vector.load %arg5[%c0_9, %c0_10] : memref<1x25xf32, #tpu.memory_space<vmem>>, vector<1x25xf32>
    %11 = vector.broadcast %10 : vector<1x25xf32> to vector<8x25xf32>
    %12 = arith.addf %9, %11 : vector<8x25xf32>
    %cst_11 = arith.constant 0.000000e+00 : f32
    %13 = vector.broadcast %cst_11 : f32 to vector<8x25xf32>
    %14 = arith.maximumf %12, %13 : vector<8x25xf32>
    %c0_12 = arith.constant 0 : index
    %c0_13 = arith.constant 0 : index
    %15 = vector.load %arg6[%c0_12, %c0_13] : memref<25x1xf32, #tpu.memory_space<vmem>>, vector<25x1xf32>
    %cst_14 = arith.constant dense<0.000000e+00> : vector<8x1xf32>
    %16 = tpu.matmul %14, %15, %cst_14 {dimension_numbers = #tpu.dot_dimension_numbers<[1], [0], [0], [1], [0, 0, 1, 1], [], []>} : vector<8x25xf32>, vector<25x1xf32>, vector<8x1xf32> -> vector<8x1xf32>
    %c0_15 = arith.constant 0 : index
    %c0_16 = arith.constant 0 : index
    %17 = vector.load %arg7[%c0_15, %c0_16] : memref<1x1xf32, #tpu.memory_space<vmem>>, vector<1x1xf32>
    %18 = vector.broadcast %17 : vector<1x1xf32> to vector<8x1xf32>
    %19 = arith.addf %16, %18 : vector<8x1xf32>
    %cst_17 = arith.constant 0.000000e+00 : f32
    %20 = vector.broadcast %cst_17 : f32 to vector<8x1xf32>
    %21 = arith.subf %20, %19 : vector<8x1xf32>
    %22 = math.exp %21 : vector<8x1xf32>
    %cst_18 = arith.constant 1.000000e+00 : f32
    %23 = vector.broadcast %cst_18 : f32 to vector<8x1xf32>
    %24 = arith.addf %23, %22 : vector<8x1xf32>
    %25 = tpu.reciprocal %24 : vector<8x1xf32> -> vector<8x1xf32>
    %c0_19 = arith.constant 0 : index
    %c0_20 = arith.constant 0 : index
    %26 = vector.load %arg8[%c0_19, %c0_20] : memref<8x1xf32, #tpu.memory_space<vmem>>, vector<8x1xf32>
    tpu.vector_store %arg8[%c0_19, %c0_20], %25 {strides = array<i32>} : memref<8x1xf32, #tpu.memory_space<vmem>>, vector<8x1xf32>,
    return
  }
  func.func @transform_0(%arg0: i32) -> (i32, i32) {
    %c0_i32 = arith.constant 0 : i32
    %c0_i32_0 = arith.constant 0 : i32
    return %arg0, %c0_i32 : i32, i32
  }
  func.func @transform_1(%arg0: i32) -> (i32, i32) {
    %c0_i32 = arith.constant 0 : i32
    %c0_i32_0 = arith.constant 0 : i32
    %c0_i32_1 = arith.constant 0 : i32
    return %c0_i32, %c0_i32_0 : i32, i32
  }
  func.func @transform_2(%arg0: i32) -> (i32, i32) {
    %c0_i32 = arith.constant 0 : i32
    %c0_i32_0 = arith.constant 0 : i32
    %c0_i32_1 = arith.constant 0 : i32
    return %c0_i32, %c0_i32_0 : i32, i32
  }
  func.func @transform_3(%arg0: i32) -> (i32, i32) {
    %c0_i32 = arith.constant 0 : i32
    %c0_i32_0 = arith.constant 0 : i32
    %c0_i32_1 = arith.constant 0 : i32
    return %c0_i32, %c0_i32_0 : i32, i32
  }
  func.func @transform_4(%arg0: i32) -> (i32, i32) {
    %c0_i32 = arith.constant 0 : i32
    %c0_i32_0 = arith.constant 0 : i32
    %c0_i32_1 = arith.constant 0 : i32
    return %c0_i32, %c0_i32_0 : i32, i32
  }
  func.func @transform_5(%arg0: i32) -> (i32, i32) {
    %c0_i32 = arith.constant 0 : i32
    %c0_i32_0 = arith.constant 0 : i32
    %c0_i32_1 = arith.constant 0 : i32
    return %c0_i32, %c0_i32_0 : i32, i32
  }
  func.func @transform_6(%arg0: i32) -> (i32, i32) {
    %c0_i32 = arith.constant 0 : i32
    %c0_i32_0 = arith.constant 0 : i32
    %c0_i32_1 = arith.constant 0 : i32
    return %c0_i32, %c0_i32_0 : i32, i32
  }
  func.func @transform_7(%arg0: i32) -> (i32, i32) {
    %c0_i32 = arith.constant 0 : i32
    %c0_i32_0 = arith.constant 0 : i32
    return %arg0, %c0_i32 : i32, i32
  }
}

</mosaic_0001>

<llo_original>
// kernel: mlp_forward.1
$region0: #{mlp_forward.1}
  #allocation0 [shape = 'u32[]', space=smem, size = 0x4, offset = 0x4, fixed_abs, tag = 'smem constant byte address 0x4 - core index']
  #allocation1 [shape = 'u32[144,128]{1,0:T(1,128)}', space=vmem, size = 0x12000, scoped, tag = 'internal scratch']
  #allocation2 [shape = 'f32[1,1]{1,0:T(1,128)S(1)}', space=vmem, size = 0x200, scoped, tag = 'scoped memory for mlp_forward.1']
  %s0 = inlined_call_operand.vmem [shape: f32[8,32], index: 0, kind: input, shape index: {}]
  %s1 = inlined_call_operand.vmem [shape: f32[32,50], index: 1, kind: input, shape index: {}]
  %s2 = inlined_call_operand.vmem [shape: f32[1,50], index: 2, kind: input, shape index: {}]
  %s3 = inlined_call_operand.vmem [shape: f32[50,25], index: 3, kind: input, shape index: {}]
  %s4 = inlined_call_operand.vmem [shape: f32[1,25], index: 4, kind: input, shape index: {}]
  %s5 = inlined_call_operand.vmem [shape: f32[25,1], index: 5, kind: input, shape index: {}]
  %s6 = inlined_call_operand.<no memory space> [shape: f32[1,1], index: 6, kind: input, shape index: {}]
  %s7 = inlined_call_operand.vmem [shape: f32[8,1], index: 7, kind: output, shape index: {}]
  %s8 = sld [smem:[#allocation0]]
  $region38: #{mlp_forward.1} parent=0
    _
  %s10 = ssub.s32 1, %s8
  %s11 = scalar_select 0, %s10, %s8
  %v12 = vstv %s6
  %13 = vst [vmem:[#allocation2] sm:$0x1] %v12
  // Predicated region
  $region2: #{mlp_forward.1} parent=0 // pred_check
    _
  $region3: #{mlp_forward.1} parent=0 // pred_check_branch
    %15 = sbr.rel (0) target = $region5
  $region4: #{mlp_forward.1} parent=0 // pred_region
    _
  $region5: #{mlp_forward.1} parent=0 // pred_fallthru
    _
  // Predicated region
  $region6: #{mlp_forward.1} parent=0 // pred_check
    _
  $region7: #{mlp_forward.1} parent=0 // pred_check_branch
    %17 = sbr.rel (0) target = $region9
  $region8: #{mlp_forward.1} parent=0 // pred_region
    _
  $region9: #{mlp_forward.1} parent=0 // pred_fallthru
    _
  // Predicated region
  $region10: #{mlp_forward.1} parent=0 // pred_check
    _
  $region11: #{mlp_forward.1} parent=0 // pred_check_branch
    %19 = sbr.rel (0) target = $region13
  $region12: #{mlp_forward.1} parent=0 // pred_region
    _
  $region13: #{mlp_forward.1} parent=0 // pred_fallthru
    _
  // Predicated region
  $region14: #{mlp_forward.1} parent=0 // pred_check
    _
  $region15: #{mlp_forward.1} parent=0 // pred_check_branch
    %21 = sbr.rel (0) target = $region17
  $region16: #{mlp_forward.1} parent=0 // pred_region
    _
  $region17: #{mlp_forward.1} parent=0 // pred_fallthru
    _
  // Predicated region
  $region18: #{mlp_forward.1} parent=0 // pred_check
    _
  $region19: #{mlp_forward.1} parent=0 // pred_check_branch
    %23 = sbr.rel (0) target = $region21
  $region20: #{mlp_forward.1} parent=0 // pred_region
    _
  $region21: #{mlp_forward.1} parent=0 // pred_fallthru
    _
  // Predicated region
  $region22: #{mlp_forward.1} parent=0 // pred_check
    _
  $region23: #{mlp_forward.1} parent=0 // pred_check_branch
    %25 = sbr.rel (0) target = $region25
  $region24: #{mlp_forward.1} parent=0 // pred_region
    _
  $region25: #{mlp_forward.1} parent=0 // pred_fallthru
    _
  // Predicated region
  $region26: #{mlp_forward.1} parent=0 // pred_check
    _
  $region27: #{mlp_forward.1} parent=0 // pred_check_branch
    %27 = sbr.rel (0) target = $region29
  $region28: #{mlp_forward.1} parent=0 // pred_region
    _
  $region29: #{mlp_forward.1} parent=0 // pred_fallthru
    _
  %v28 = vld [vmem:[%s0] sm:$0xff]
  %v29 = vld [vmem:[%s1] sm:$0xff]
  %v30 = vld [vmem:[%s1 + $0x8] sm:$0xff]
  %v31 = vld [vmem:[%s1 + $0x10] sm:$0xff]
  %v32 = vld [vmem:[%s1 + $0x18] sm:$0xff]
  %v33 = vld [vmem:[%s2] sm:$0x1]
  %v35 = vlaneseq
  %v36 = vshrl.u32 %v35, 7
  %v37 = vsub.s32 0, %v36
  %v38 = vrot.slane %v33, %v37
  %vm40 = vcmask 261120
  %v42 = vsel %vm40, %v28, 0
  %44 = vmatprep.subr.mxu0 0.0
  %45 = vmatpush1.msra.mxu0 %v29
  %46 = vmatprep.subr.mxu0 0.0
  %47 = vmatpush1.msra.mxu0 %v30
  %48 = vmatprep.subr.mxu0 0.0
  %49 = vmatpush1.msra.mxu0 %v31
  %50 = vmatprep.subr.mxu0 0.0
  %51 = vmatpush1.msra.mxu0 %v32
  %52 = vmatprep.subr.mxu0 0.0
  %53 = vmatpush1.msra.mxu0 0.0
  %54 = vmatprep.subr.mxu0 0.0
  %55 = vmatpush1.msra.mxu0 0.0
  %56 = vmatprep.subr.mxu0 0.0
  %57 = vmatpush1.msra.mxu0 0.0
  %58 = vmatprep.subr.mxu0 0.0
  %59 = vmatpush1.msra.mxu0 0.0
  %60 = vmatprep.subr.mxu0 0.0
  %61 = vmatpush1.msra.mxu0 0.0
  %62 = vmatprep.subr.mxu0 0.0
  %63 = vmatpush1.msra.mxu0 0.0
  %64 = vmatprep.subr.mxu0 0.0
  %65 = vmatpush1.msra.mxu0 0.0
  %66 = vmatprep.subr.mxu0 0.0
  %67 = vmatpush1.msra.mxu0 0.0
  %68 = vmatprep.subr.mxu0 0.0
  %69 = vmatpush1.msra.mxu0 0.0
  %70 = vmatprep.subr.mxu0 0.0
  %71 = vmatpush1.msra.mxu0 0.0
  %72 = vmatprep.subr.mxu0 0.0
  %73 = vmatpush1.msra.mxu0 0.0
  %74 = vmatprep.subr.mxu0 0.0
  %75 = vmatpush1.msra.mxu0 0.0
  %76 = vmatprep.subr.mxu0 0.0
  %77 = vmatpush1.msra.mxu0 0.0
  %78 = vmatprep.subr.mxu0 0.0
  %79 = vmatpush1.msra.mxu0 0.0
  %80 = vmatprep.subr.mxu0 0.0
  %81 = vmatpush1.msra.mxu0 0.0
  %82 = vmatprep.subr.mxu0 0.0
  %83 = vmatpush1.msra.mxu0 0.0
  %84 = vmatprep.subr.mxu0 0.0
  %85 = vmatpush1.msra.mxu0 0.0
  %86 = vmatprep.subr.mxu0 0.0
  %87 = vmatpush1.msra.mxu0 0.0
  %88 = vmatprep.subr.mxu0 0.0
  %89 = vmatpush1.msra.mxu0 0.0
  %90 = vmatprep.subr.mxu0 0.0
  %91 = vmatpush1.msra.mxu0 0.0
  %92 = vmatprep.subr.mxu0 0.0
  %93 = vmatpush1.msra.mxu0 0.0
  %94 = vmatprep.subr.mxu0 0.0
  %95 = vmatpush1.msra.mxu0 0.0
  %96 = vmatprep.subr.mxu0 0.0
  %97 = vmatpush1.msra.mxu0 0.0
  %98 = vmatprep.subr.mxu0 0.0
  %99 = vmatpush1.msra.mxu0 0.0
  %100 = vmatprep.subr.mxu0 0.0
  %101 = vmatpush1.msra.mxu0 0.0
  %102 = vmatprep.subr.mxu0 0.0
  %103 = vmatpush1.msra.mxu0 0.0
  %104 = vmatprep.subr.mxu0 0.0
  %105 = vmatpush1.msra.mxu0 0.0
  %106 = vmatprep.subr.mxu0 0.0
  %107 = vmatpush1.msra.mxu0 0.0
  %108 = vmatprep.mubr.f32.mxu0 0.0
  %109 = vmatmul.mubr.f32.gmra.mrb[0].mxu0 %v42
  %v110 = vpop.f32.mrb[0].mxu0
  %v111 = vadd.f32 %v38, %v110
  %v112 = vpop.f32.mrb[0].mxu0
  %113 = vdwg.mxu0
  %v114 = vmax.f32 %v111, 0.0
  %v115 = vld [vmem:[%s3] sm:$0xff]
  %v116 = vld [vmem:[%s3 + $0x8] sm:$0xff]
  %v117 = vld [vmem:[%s3 + $0x10] sm:$0xff]
  %v118 = vld [vmem:[%s3 + $0x18] sm:$0xff]
  %v119 = vld [vmem:[%s3 + $0x20] sm:$0xff]
  %v120 = vld [vmem:[%s3 + $0x28] sm:$0xff]
  %v121 = vld [vmem:[%s3 + $0x30] sm:$0x3]
  %v122 = vld [vmem:[%s4] sm:$0x1]
  %v124 = vlaneseq
  %v125 = vshrl.u32 %v124, 7
  %v126 = vsub.s32 0, %v125
  %v127 = vrot.slane %v122, %v126
  %vm129 = vcmask 408576
  %v131 = vsel %vm129, %v114, 0
  %vm133 = vcmask 1041408
  %v135 = vsel %vm133, %v121, 0
  %137 = vmatprep.subr.mxu0 0.0
  %138 = vmatpush1.msra.mxu0 %v115
  %139 = vmatprep.subr.mxu0 0.0
  %140 = vmatpush1.msra.mxu0 %v116
  %141 = vmatprep.subr.mxu0 0.0
  %142 = vmatpush1.msra.mxu0 %v117
  %143 = vmatprep.subr.mxu0 0.0
  %144 = vmatpush1.msra.mxu0 %v118
  %145 = vmatprep.subr.mxu0 0.0
  %146 = vmatpush1.msra.mxu0 %v119
  %147 = vmatprep.subr.mxu0 0.0
  %148 = vmatpush1.msra.mxu0 %v120
  %149 = vmatprep.subr.mxu0 0.0
  %150 = vmatpush1.msra.mxu0 %v135
  %151 = vmatprep.subr.mxu0 0.0
  %152 = vmatpush1.msra.mxu0 0.0
  %153 = vmatprep.subr.mxu0 0.0
  %154 = vmatpush1.msra.mxu0 0.0
  %155 = vmatprep.subr.mxu0 0.0
  %156 = vmatpush1.msra.mxu0 0.0
  %157 = vmatprep.subr.mxu0 0.0
  %158 = vmatpush1.msra.mxu0 0.0
  %159 = vmatprep.subr.mxu0 0.0
  %160 = vmatpush1.msra.mxu0 0.0
  %161 = vmatprep.subr.mxu0 0.0
  %162 = vmatpush1.msra.mxu0 0.0
  %163 = vmatprep.subr.mxu0 0.0
  %164 = vmatpush1.msra.mxu0 0.0
  %165 = vmatprep.subr.mxu0 0.0
  %166 = vmatpush1.msra.mxu0 0.0
  %167 = vmatprep.subr.mxu0 0.0
  %168 = vmatpush1.msra.mxu0 0.0
  %169 = vmatprep.subr.mxu0 0.0
  %170 = vmatpush1.msra.mxu0 0.0
  %171 = vmatprep.subr.mxu0 0.0
  %172 = vmatpush1.msra.mxu0 0.0
  %173 = vmatprep.subr.mxu0 0.0
  %174 = vmatpush1.msra.mxu0 0.0
  %175 = vmatprep.subr.mxu0 0.0
  %176 = vmatpush1.msra.mxu0 0.0
  %177 = vmatprep.subr.mxu0 0.0
  %178 = vmatpush1.msra.mxu0 0.0
  %179 = vmatprep.subr.mxu0 0.0
  %180 = vmatpush1.msra.mxu0 0.0
  %181 = vmatprep.subr.mxu0 0.0
  %182 = vmatpush1.msra.mxu0 0.0
  %183 = vmatprep.subr.mxu0 0.0
  %184 = vmatpush1.msra.mxu0 0.0
  %185 = vmatprep.subr.mxu0 0.0
  %186 = vmatpush1.msra.mxu0 0.0
  %187 = vmatprep.subr.mxu0 0.0
  %188 = vmatpush1.msra.mxu0 0.0
  %189 = vmatprep.subr.mxu0 0.0
  %190 = vmatpush1.msra.mxu0 0.0
  %191 = vmatprep.subr.mxu0 0.0
  %192 = vmatpush1.msra.mxu0 0.0
  %193 = vmatprep.subr.mxu0 0.0
  %194 = vmatpush1.msra.mxu0 0.0
  %195 = vmatprep.subr.mxu0 0.0
  %196 = vmatpush1.msra.mxu0 0.0
  %197 = vmatprep.subr.mxu0 0.0
  %198 = vmatpush1.msra.mxu0 0.0
  %199 = vmatprep.subr.mxu0 0.0
  %200 = vmatpush1.msra.mxu0 0.0
  %201 = vmatprep.mubr.f32.mxu0 0.0
  %202 = vmatmul.mubr.f32.gmra.mrb[0].mxu0 %v131
  %v203 = vpop.f32.mrb[0].mxu0
  %v204 = vadd.f32 %v127, %v203
  %v205 = vpop.f32.mrb[0].mxu0
  %206 = vdwg.mxu0
  %v207 = vmax.f32 %v204, 0.0
  %v208 = vld [vmem:[%s5] sm:$0xff]
  %v209 = vld [vmem:[%s5 + $0x8] sm:$0xff]
  %v210 = vld [vmem:[%s5 + $0x10] sm:$0xff]
  %v211 = vld [vmem:[%s5 + $0x18] sm:$0x1]
  %v212 = vld [vmem:[#allocation2] sm:$0x1]
  %v214 = vlaneseq
  %v215 = vshrl.u32 %v214, 7
  %v216 = vsub.s32 0, %v215
  %v217 = vrot.slane %v212, %v216
  %vm219 = vcmask 203776
  %v221 = vsel %vm219, %v207, 0
  %vm223 = vcmask 1040384
  %v225 = vsel %vm223, %v211, 0
  %227 = vmatprep.subr.mxu0 0.0
  %228 = vmatpush1.msra.mxu0 %v208
  %229 = vmatprep.subr.mxu0 0.0
  %230 = vmatpush1.msra.mxu0 %v209
  %231 = vmatprep.subr.mxu0 0.0
  %232 = vmatpush1.msra.mxu0 %v210
  %233 = vmatprep.subr.mxu0 0.0
  %234 = vmatpush1.msra.mxu0 %v225
  %235 = vmatprep.subr.mxu0 0.0
  %236 = vmatpush1.msra.mxu0 0.0
  %237 = vmatprep.subr.mxu0 0.0
  %238 = vmatpush1.msra.mxu0 0.0
  %239 = vmatprep.subr.mxu0 0.0
  %240 = vmatpush1.msra.mxu0 0.0
  %241 = vmatprep.subr.mxu0 0.0
  %242 = vmatpush1.msra.mxu0 0.0
  %243 = vmatprep.subr.mxu0 0.0
  %244 = vmatpush1.msra.mxu0 0.0
  %245 = vmatprep.subr.mxu0 0.0
  %246 = vmatpush1.msra.mxu0 0.0
  %247 = vmatprep.subr.mxu0 0.0
  %248 = vmatpush1.msra.mxu0 0.0
  %249 = vmatprep.subr.mxu0 0.0
  %250 = vmatpush1.msra.mxu0 0.0
  %251 = vmatprep.subr.mxu0 0.0
  %252 = vmatpush1.msra.mxu0 0.0
  %253 = vmatprep.subr.mxu0 0.0
  %254 = vmatpush1.msra.mxu0 0.0
  %255 = vmatprep.subr.mxu0 0.0
  %256 = vmatpush1.msra.mxu0 0.0
  %257 = vmatprep.subr.mxu0 0.0
  %258 = vmatpush1.msra.mxu0 0.0
  %259 = vmatprep.subr.mxu0 0.0
  %260 = vmatpush1.msra.mxu0 0.0
  %261 = vmatprep.subr.mxu0 0.0
  %262 = vmatpush1.msra.mxu0 0.0
  %263 = vmatprep.subr.mxu0 0.0
  %264 = vmatpush1.msra.mxu0 0.0
  %265 = vmatprep.subr.mxu0 0.0
  %266 = vmatpush1.msra.mxu0 0.0
  %267 = vmatprep.subr.mxu0 0.0
  %268 = vmatpush1.msra.mxu0 0.0
  %269 = vmatprep.subr.mxu0 0.0
  %270 = vmatpush1.msra.mxu0 0.0
  %271 = vmatprep.subr.mxu0 0.0
  %272 = vmatpush1.msra.mxu0 0.0
  %273 = vmatprep.subr.mxu0 0.0
  %274 = vmatpush1.msra.mxu0 0.0
  %275 = vmatprep.subr.mxu0 0.0
  %276 = vmatpush1.msra.mxu0 0.0
  %277 = vmatprep.subr.mxu0 0.0
  %278 = vmatpush1.msra.mxu0 0.0
  %279 = vmatprep.subr.mxu0 0.0
  %280 = vmatpush1.msra.mxu0 0.0
  %281 = vmatprep.subr.mxu0 0.0
  %282 = vmatpush1.msra.mxu0 0.0
  %283 = vmatprep.subr.mxu0 0.0
  %284 = vmatpush1.msra.mxu0 0.0
  %285 = vmatprep.subr.mxu0 0.0
  %286 = vmatpush1.msra.mxu0 0.0
  %287 = vmatprep.subr.mxu0 0.0
  %288 = vmatpush1.msra.mxu0 0.0
  %289 = vmatprep.subr.mxu0 0.0
  %290 = vmatpush1.msra.mxu0 0.0
  %291 = vmatprep.mubr.f32.mxu0 0.0
  %292 = vmatmul.mubr.f32.gmra.mrb[0].mxu0 %v221
  %v293 = vpop.f32.mrb[0].mxu0
  %v294 = vadd.f32 %v217, %v293
  %v295 = vpop.f32.mrb[0].mxu0
  %296 = vdwg.mxu0
  %v297 = vsub.f32 0.0, %v294
  %v298 = vmul.f32 %v297, 1.442695
  %v299 = vpow.pop %v298
  %v300 = vadd.f32 %v299, 1.0
  %v301 = vrcp.pop %v300
  %vm302 = vcmask 7168
  %303 = vst.msk [vmem:[%s7] sm:$0xff] %vm302, %v301
  // Predicated region
  $region30: #{mlp_forward.1} parent=0 // pred_check
    _
  $region31: #{mlp_forward.1} parent=0 // pred_check_branch
    %305 = sbr.rel (0) target = $region33
  $region32: #{mlp_forward.1} parent=0 // pred_region
    _
  $region33: #{mlp_forward.1} parent=0 // pred_fallthru
    _
  // Predicated region
  $region34: #{mlp_forward.1} parent=0 // pred_check
    _
  $region35: #{mlp_forward.1} parent=0 // pred_check_branch
    %307 = sbr.rel (0) target = $region37
  $region36: #{mlp_forward.1} parent=0 // pred_region
    _
  $region37: #{mlp_forward.1} parent=0 // pred_fallthru
    _

</llo_original>
